<compile_context>
chip_gen: v5e
topology: v5e:2x2
jax: 0.10.0
libtpu: 0.0.40
codegen_flags: <defaults>
</compile_context>

<pallas_src>
import functools

import jax
import jax.numpy as jnp
from jax.experimental import pallas as pl
from jax.experimental.pallas import tpu as pltpu

IMAGE_SIZE = 28 * 28      # 784
FIRST_LAYER = 100
SECOND_LAYER = 50
OUTPUT_SIZE = 10
LANE = 128                # padded feature width (lane-dense layout)
NEG_BIG = -1e30           # "-inf" stand-in for masked logits columns


def linear_net_kernel(x_ref, w0_ref, b0_ref, w1_ref, b1_ref, w2_ref, b2_ref,
                      out_ref):
    x = x_ref[...]                                            # (TB, 784) bf16

    # fc0 + relu: bf16 MXU operands, f32 accumulate + f32 VPU math.
    h0 = jnp.dot(x, w0_ref[...], preferred_element_type=jnp.float32) + b0_ref[...]
    h0 = jnp.maximum(h0, 0.0).astype(jnp.bfloat16)            # (TB, 128)

    # fc1 + relu
    h1 = jnp.dot(h0, w1_ref[...], preferred_element_type=jnp.float32) + b1_ref[...]
    h1 = jnp.maximum(h1, 0.0).astype(jnp.bfloat16)            # (TB, 128)

    # fc2 (f32 logits)
    logits = jnp.dot(h1, w2_ref[...], preferred_element_type=jnp.float32) + b2_ref[...]

    # log_softmax over the first OUTPUT_SIZE columns; padded cols masked out.
    col = jax.lax.broadcasted_iota(jnp.int32, logits.shape, 1)
    masked = jnp.where(col < OUTPUT_SIZE, logits, NEG_BIG)
    m = jnp.max(masked, axis=1, keepdims=True)
    z = masked - m
    lse = jnp.log(jnp.sum(jnp.exp(z), axis=1, keepdims=True))
    out_ref[...] = z - lse                                    # (TB, 128) f32


def _round_up(n, m):
    return -(-n // m) * m


def prepare_params(params):
    """Zero-pad weights/biases to 128-lane widths.  Weights -> bf16 (MXU
    operands), biases -> f32.  Call ONCE, outside the per-step forward."""
    w0, b0, w1, b1, w2, b2 = params
    w0p = (jnp.zeros((IMAGE_SIZE, LANE), jnp.float32)
           .at[:, :FIRST_LAYER].set(w0).astype(jnp.bfloat16))
    b0p = jnp.zeros((1, LANE), jnp.float32).at[:, :FIRST_LAYER].set(b0)
    w1p = (jnp.zeros((LANE, LANE), jnp.float32)
           .at[:FIRST_LAYER, :SECOND_LAYER].set(w1).astype(jnp.bfloat16))
    b1p = jnp.zeros((1, LANE), jnp.float32).at[:, :SECOND_LAYER].set(b1)
    w2p = (jnp.zeros((LANE, LANE), jnp.float32)
           .at[:SECOND_LAYER, :OUTPUT_SIZE].set(w2).astype(jnp.bfloat16))
    b2p = jnp.zeros((1, LANE), jnp.float32).at[:, :OUTPUT_SIZE].set(b2)
    return w0p, b0p, w1p, b1p, w2p, b2p


@functools.partial(jax.jit, static_argnames=("block_b",))
def linear_net_forward(x_images, prepared_params, *, block_b=1024):
    """x_images: (B, 1, 28, 28) float -> log-probabilities (B, 10) float32."""
    b = x_images.shape[0]
    x = x_images.reshape(b, -1).astype(jnp.bfloat16)   # == x.view(-1, image_size)
    assert x.shape[1] == IMAGE_SIZE
    w0, b0, w1, b1, w2, b2 = prepared_params

    # Batch tile: multiple of 8 sublanes, capped at block_b.  If that would
    # give a single grid step, halve it so both v7x TensorCores get work.
    tb = min(block_b, _round_up(b, 8))
    if -(-b // tb) < 2 and tb >= 16:
        tb = _round_up(-(-tb // 2), 8)
    num_tiles = -(-b // tb)            # cdiv; Pallas masks the partial last tile

    def batch_spec(width):
        return pl.BlockSpec((tb, width), lambda i: (i, 0))

    def resident_spec(shape):
        # Constant block index -> stays resident in VMEM across all batch tiles.
        return pl.BlockSpec(shape, lambda i: (0, 0))

    weight_bytes = (IMAGE_SIZE * LANE + 2 * LANE * LANE) * 2 + 3 * LANE * 4
    cost = pl.CostEstimate(
        flops=2 * b * (IMAGE_SIZE * LANE + 2 * LANE * LANE),
        transcendentals=b * LANE,
        bytes_accessed=b * IMAGE_SIZE * 2 + b * LANE * 4 + weight_bytes,
    )

    out_padded = pl.pallas_call(
        linear_net_kernel,
        out_shape=jax.ShapeDtypeStruct((b, LANE), jnp.float32),
        grid=(num_tiles,),
        in_specs=[
            batch_spec(IMAGE_SIZE),            # x tile, streamed (bf16)
            resident_spec((IMAGE_SIZE, LANE)), # w0 (bf16)
            resident_spec((1, LANE)),          # b0 (f32)
            resident_spec((LANE, LANE)),       # w1 (bf16)
            resident_spec((1, LANE)),          # b1 (f32)
            resident_spec((LANE, LANE)),       # w2 (bf16)
            resident_spec((1, LANE)),          # b2 (f32)
        ],
        out_specs=batch_spec(LANE),
        compiler_params=pltpu.CompilerParams(
            dimension_semantics=("parallel",)),
        cost_estimate=cost,
    )(x, w0, b0, w1, b1, w2, b2)

    return out_padded[:, :OUTPUT_SIZE]


def init_params(key):
    """Deterministic init matching nn.Linear (weights stored (in, out), f32)."""
    def linear(key, fan_in, fan_out):
        kw, kb = jax.random.split(key)
        bound = 1.0 / jnp.sqrt(fan_in)
        w = jax.random.uniform(kw, (fan_in, fan_out), jnp.float32, -bound, bound)
        b = jax.random.uniform(kb, (1, fan_out), jnp.float32, -bound, bound)
        return w, b

    k0, k1, k2 = jax.random.split(key, 3)
    w0, b0 = linear(k0, IMAGE_SIZE, FIRST_LAYER)
    w1, b1 = linear(k1, FIRST_LAYER, SECOND_LAYER)
    w2, b2 = linear(k2, SECOND_LAYER, OUTPUT_SIZE)
    return (w0, b0, w1, b1, w2, b2)


def reference_forward(x_images, params):
    """Pure-JAX reference with matching bf16 matmuls / f32 accumulation."""
    x = x_images.reshape(x_images.shape[0], -1).astype(jnp.bfloat16)
    w0, b0, w1, b1, w2, b2 = params
    h0 = jnp.maximum(
        jnp.dot(x, w0.astype(jnp.bfloat16), preferred_element_type=jnp.float32) + b0,
        0.0).astype(jnp.bfloat16)
    h1 = jnp.maximum(
        jnp.dot(h0, w1.astype(jnp.bfloat16), preferred_element_type=jnp.float32) + b1,
        0.0).astype(jnp.bfloat16)
    logits = jnp.dot(h1, w2.astype(jnp.bfloat16),
                     preferred_element_type=jnp.float32) + b2
    return jax.nn.log_softmax(logits, axis=1)


if __name__ == "__main__":
    key = jax.random.PRNGKey(0)
    k_params, k_x = jax.random.split(key)

    params = init_params(k_params)
    prepared = prepare_params(params)          # pad + cast once, outside forward
    x = jax.random.normal(k_x, (8, 1, 28, 28), dtype=jnp.float32)

    out = linear_net_forward(x, prepared)
    out = jax.block_until_ready(out)

    assert out.shape == (8, OUTPUT_SIZE)

    ref = reference_forward(x, params)
    assert bool(jnp.all(jnp.abs(out - ref) < 2e-3)), "mismatch vs. bf16 JAX reference"

    # log_softmax rows should exponentiate-sum to ~1
    row_sums = jnp.sum(jnp.exp(out), axis=1)
    assert bool(jnp.all(jnp.abs(row_sums - 1.0) < 1e-3))

    print("KERNEL_OK")
</pallas_src>

<mosaic_0001>
module attributes {stable_mosaic.version = 11 : i64} {
  func.func @linear_net_kernel(%arg0: i32, %arg1: memref<8x784xbf16, #tpu.memory_space<vmem>>, %arg2: memref<784x128xbf16, #tpu.memory_space<vmem>>, %arg3: memref<1x128xf32, #tpu.memory_space<vmem>>, %arg4: memref<128x128xbf16, #tpu.memory_space<vmem>>, %arg5: memref<1x128xf32, #tpu.memory_space<vmem>>, %arg6: memref<128x128xbf16, #tpu.memory_space<vmem>>, %arg7: memref<1x128xf32, #tpu.memory_space<vmem>>, %arg8: memref<8x128xf32, #tpu.memory_space<vmem>>) attributes {dimension_semantics = [#tpu.dimension_semantics<parallel>], iteration_bounds = array<i64: 1>, scalar_prefetch = 0 : i64, scratch_operands = 0 : i64, tpu.core_type = #tpu.core_type<tc>, window_params = [{transform_indices = @transform_0, window_bounds = array<i64: 8, 784>}, {pipeline_mode = #tpu.pipeline_mode<synchronous>, transform_indices = @transform_1, window_bounds = array<i64: 784, 128>}, {pipeline_mode = #tpu.pipeline_mode<synchronous>, transform_indices = @transform_2, window_bounds = array<i64: 1, 128>}, {pipeline_mode = #tpu.pipeline_mode<synchronous>, transform_indices = @transform_3, window_bounds = array<i64: 128, 128>}, {pipeline_mode = #tpu.pipeline_mode<synchronous>, transform_indices = @transform_4, window_bounds = array<i64: 1, 128>}, {pipeline_mode = #tpu.pipeline_mode<synchronous>, transform_indices = @transform_5, window_bounds = array<i64: 128, 128>}, {pipeline_mode = #tpu.pipeline_mode<synchronous>, transform_indices = @transform_6, window_bounds = array<i64: 1, 128>}, {transform_indices = @transform_7, window_bounds = array<i64: 8, 128>}]} {
    %c0 = arith.constant 0 : index
    %c0_0 = arith.constant 0 : index
    %0 = vector.load %arg1[%c0, %c0_0] : memref<8x784xbf16, #tpu.memory_space<vmem>>, vector<8x784xbf16>
    %c0_1 = arith.constant 0 : index
    %c0_2 = arith.constant 0 : index
    %1 = vector.load %arg2[%c0_1, %c0_2] : memref<784x128xbf16, #tpu.memory_space<vmem>>, vector<784x128xbf16>
    %cst = arith.constant dense<0.000000e+00> : vector<8x128xf32>
    %2 = tpu.matmul %0, %1, %cst {dimension_numbers = #tpu.dot_dimension_numbers<[1], [0], [0], [1], [0, 0, 1, 1], [], []>} : vector<8x784xbf16>, vector<784x128xbf16>, vector<8x128xf32> -> vector<8x128xf32>
    %c0_3 = arith.constant 0 : index
    %c0_4 = arith.constant 0 : index
    %3 = vector.load %arg3[%c0_3, %c0_4] : memref<1x128xf32, #tpu.memory_space<vmem>>, vector<1x128xf32>
    %4 = vector.broadcast %3 : vector<1x128xf32> to vector<8x128xf32>
    %5 = arith.addf %2, %4 : vector<8x128xf32>
    %cst_5 = arith.constant 0.000000e+00 : f32
    %6 = vector.broadcast %cst_5 : f32 to vector<8x128xf32>
    %7 = arith.maximumf %5, %6 : vector<8x128xf32>
    %8 = arith.truncf %7 : vector<8x128xf32> to vector<8x128xbf16>
    %c0_6 = arith.constant 0 : index
    %c0_7 = arith.constant 0 : index
    %9 = vector.load %arg4[%c0_6, %c0_7] : memref<128x128xbf16, #tpu.memory_space<vmem>>, vector<128x128xbf16>
    %cst_8 = arith.constant dense<0.000000e+00> : vector<8x128xf32>
    %10 = tpu.matmul %8, %9, %cst_8 {dimension_numbers = #tpu.dot_dimension_numbers<[1], [0], [0], [1], [0, 0, 1, 1], [], []>} : vector<8x128xbf16>, vector<128x128xbf16>, vector<8x128xf32> -> vector<8x128xf32>
    %c0_9 = arith.constant 0 : index
    %c0_10 = arith.constant 0 : index
    %11 = vector.load %arg5[%c0_9, %c0_10] : memref<1x128xf32, #tpu.memory_space<vmem>>, vector<1x128xf32>
    %12 = vector.broadcast %11 : vector<1x128xf32> to vector<8x128xf32>
    %13 = arith.addf %10, %12 : vector<8x128xf32>
    %cst_11 = arith.constant 0.000000e+00 : f32
    %14 = vector.broadcast %cst_11 : f32 to vector<8x128xf32>
    %15 = arith.maximumf %13, %14 : vector<8x128xf32>
    %16 = arith.truncf %15 : vector<8x128xf32> to vector<8x128xbf16>
    %c0_12 = arith.constant 0 : index
    %c0_13 = arith.constant 0 : index
    %17 = vector.load %arg6[%c0_12, %c0_13] : memref<128x128xbf16, #tpu.memory_space<vmem>>, vector<128x128xbf16>
    %cst_14 = arith.constant dense<0.000000e+00> : vector<8x128xf32>
    %18 = tpu.matmul %16, %17, %cst_14 {dimension_numbers = #tpu.dot_dimension_numbers<[1], [0], [0], [1], [0, 0, 1, 1], [], []>} : vector<8x128xbf16>, vector<128x128xbf16>, vector<8x128xf32> -> vector<8x128xf32>
    %c0_15 = arith.constant 0 : index
    %c0_16 = arith.constant 0 : index
    %19 = vector.load %arg7[%c0_15, %c0_16] : memref<1x128xf32, #tpu.memory_space<vmem>>, vector<1x128xf32>
    %20 = vector.broadcast %19 : vector<1x128xf32> to vector<8x128xf32>
    %21 = arith.addf %18, %20 : vector<8x128xf32>
    %22 = tpu.iota {dimensions = array<i32: 1>} : vector<8x128xi32>
    %c10_i32 = arith.constant 10 : i32
    %23 = vector.broadcast %c10_i32 : i32 to vector<8x128xi32>
    %24 = arith.cmpi slt, %22, %23 : vector<8x128xi32>
    %cst_17 = arith.constant -1.000000e+30 : f32
    %25 = vector.broadcast %cst_17 : f32 to vector<8x128xf32>
    %26 = arith.select %24, %21, %25 : vector<8x128xi1>, vector<8x128xf32>
    %cst_18 = arith.constant dense<0xFF800000> : vector<8xf32>
    %27 = vector.multi_reduction <maximumf>, %26, %cst_18 [1] : vector<8x128xf32> to vector<8xf32>
    %28 = vector.shape_cast %27 : vector<8xf32> to vector<8x1xf32>
    %29 = vector.broadcast %28 : vector<8x1xf32> to vector<8x128xf32>
    %30 = arith.subf %26, %29 : vector<8x128xf32>
    %31 = math.exp %30 : vector<8x128xf32>
    %cst_19 = arith.constant dense<0.000000e+00> : vector<8xf32>
    %32 = vector.multi_reduction <add>, %31, %cst_19 [1] : vector<8x128xf32> to vector<8xf32>
    %33 = vector.shape_cast %32 : vector<8xf32> to vector<8x1xf32>
    %34 = math.log %33 : vector<8x1xf32>
    %35 = vector.broadcast %34 : vector<8x1xf32> to vector<8x128xf32>
    %36 = arith.subf %30, %35 : vector<8x128xf32>
    %c0_20 = arith.constant 0 : index
    %c0_21 = arith.constant 0 : index
    %37 = vector.load %arg8[%c0_20, %c0_21] : memref<8x128xf32, #tpu.memory_space<vmem>>, vector<8x128xf32>
    tpu.vector_store %arg8[%c0_20, %c0_21], %36 {strides = array<i32>} : memref<8x128xf32, #tpu.memory_space<vmem>>, vector<8x128xf32>,
    return
  }
  func.func @transform_0(%arg0: i32) -> (i32, i32) {
    %c0_i32 = arith.constant 0 : i32
    %c0_i32_0 = arith.constant 0 : i32
    return %arg0, %c0_i32 : i32, i32
  }
  func.func @transform_1(%arg0: i32) -> (i32, i32) {
    %c0_i32 = arith.constant 0 : i32
    %c0_i32_0 = arith.constant 0 : i32
    %c0_i32_1 = arith.constant 0 : i32
    return %c0_i32, %c0_i32_0 : i32, i32
  }
  func.func @transform_2(%arg0: i32) -> (i32, i32) {
    %c0_i32 = arith.constant 0 : i32
    %c0_i32_0 = arith.constant 0 : i32
    %c0_i32_1 = arith.constant 0 : i32
    return %c0_i32, %c0_i32_0 : i32, i32
  }
  func.func @transform_3(%arg0: i32) -> (i32, i32) {
    %c0_i32 = arith.constant 0 : i32
    %c0_i32_0 = arith.constant 0 : i32
    %c0_i32_1 = arith.constant 0 : i32
    return %c0_i32, %c0_i32_0 : i32, i32
  }
  func.func @transform_4(%arg0: i32) -> (i32, i32) {
    %c0_i32 = arith.constant 0 : i32
    %c0_i32_0 = arith.constant 0 : i32
    %c0_i32_1 = arith.constant 0 : i32
    return %c0_i32, %c0_i32_0 : i32, i32
  }
  func.func @transform_5(%arg0: i32) -> (i32, i32) {
    %c0_i32 = arith.constant 0 : i32
    %c0_i32_0 = arith.constant 0 : i32
    %c0_i32_1 = arith.constant 0 : i32
    return %c0_i32, %c0_i32_0 : i32, i32
  }
  func.func @transform_6(%arg0: i32) -> (i32, i32) {
    %c0_i32 = arith.constant 0 : i32
    %c0_i32_0 = arith.constant 0 : i32
    %c0_i32_1 = arith.constant 0 : i32
    return %c0_i32, %c0_i32_0 : i32, i32
  }
  func.func @transform_7(%arg0: i32) -> (i32, i32) {
    %c0_i32 = arith.constant 0 : i32
    %c0_i32_0 = arith.constant 0 : i32
    return %arg0, %c0_i32 : i32, i32
  }
}

</mosaic_0001>

<llo_original>
// kernel: linear_net_forward.1
$region0: #{linear_net_forward.1}
  #allocation0 [shape = 'u32[]', space=smem, size = 0x4, offset = 0x4, fixed_abs, tag = 'smem constant byte address 0x4 - core index']
  #allocation1 [shape = 'u32[72,128]{1,0:T(1,128)}', space=vmem, size = 0x9000, scoped, tag = 'internal scratch']
  %s0 = inlined_call_operand.vmem [shape: bf16[8,784], index: 0, kind: input, shape index: {}]
  %s1 = inlined_call_operand.vmem [shape: bf16[784,128], index: 1, kind: input, shape index: {}]
  %s2 = inlined_call_operand.vmem [shape: f32[1,128], index: 2, kind: input, shape index: {}]
  %s3 = inlined_call_operand.vmem [shape: bf16[128,128], index: 3, kind: input, shape index: {}]
  %s4 = inlined_call_operand.vmem [shape: f32[1,128], index: 4, kind: input, shape index: {}]
  %s5 = inlined_call_operand.hbm [shape: bf16[128,128], index: 5, kind: input, shape index: {}]
  %s6 = inlined_call_operand.vmem [shape: f32[1,128], index: 6, kind: input, shape index: {}]
  %s7 = inlined_call_operand.hbm [shape: f32[8,128], index: 7, kind: output, shape index: {}]
  %s8 = sld [smem:[#allocation0]]
  $region42: #{linear_net_forward.1} parent=0
    _
  %s10 = ssub.s32 1, %s8
  %s11 = scalar_select 0, %s10, %s8
  $region1: #{linear_net_forward.1} parent=0
    #allocation2 [shape = 'u8[32768]{0}', space=vmem, size = 0x8000, scoped, tag = 'input window, operand 5, single buffered']
    #allocation3 [shape = 's32[1]{0}', space=sflag, size = 0x4, scoped, tag = 'scoped memory for linear_net_forward.1']
    #allocation4 [shape = 's32[1]{0}', space=sflag, size = 0x4, scoped, tag = 'scoped memory for linear_net_forward.1']
    #allocation5 [shape = 'u8[4096]{0}', space=vmem, size = 0x1000, scoped, tag = 'output window, operand 0, single buffered']
    %12 = vsyncpa [#allocation3], 0
    %13 = vsyncpa [#allocation4], 0
    // Predicated region
    $region2: #{linear_net_forward.1} parent=1 // pred_check
      _
    $region3: #{linear_net_forward.1} parent=1 // pred_check_branch
      %15 = sbr.rel (0) target = $region5
    $region4: #{linear_net_forward.1} parent=1 // pred_region
      _
    $region5: #{linear_net_forward.1} parent=1 // pred_fallthru
      _
    // Predicated region
    $region6: #{linear_net_forward.1} parent=1 // pred_check
      _
    $region7: #{linear_net_forward.1} parent=1 // pred_check_branch
      %17 = sbr.rel (0) target = $region9
    $region8: #{linear_net_forward.1} parent=1 // pred_region
      _
    $region9: #{linear_net_forward.1} parent=1 // pred_fallthru
      _
    // Predicated region
    $region10: #{linear_net_forward.1} parent=1 // pred_check
      _
    $region11: #{linear_net_forward.1} parent=1 // pred_check_branch
      %19 = sbr.rel (0) target = $region13
    $region12: #{linear_net_forward.1} parent=1 // pred_region
      _
    $region13: #{linear_net_forward.1} parent=1 // pred_fallthru
      _
    // Predicated region
    $region14: #{linear_net_forward.1} parent=1 // pred_check
      _
    $region15: #{linear_net_forward.1} parent=1 // pred_check_branch
      %21 = sbr.rel (0) target = $region17
    $region16: #{linear_net_forward.1} parent=1 // pred_region
      _
    $region17: #{linear_net_forward.1} parent=1 // pred_fallthru
      _
    // Predicated region
    $region18: #{linear_net_forward.1} parent=1 // pred_check
      _
    $region19: #{linear_net_forward.1} parent=1 // pred_check_branch
      %23 = sbr.rel (0) target = $region21
    $region20: #{linear_net_forward.1} parent=1 // pred_region
      _
    $region21: #{linear_net_forward.1} parent=1 // pred_fallthru
      _
    // Predicated region
    $region22: #{linear_net_forward.1} parent=1 // pred_check
      _
    $region23: #{linear_net_forward.1} parent=1 // pred_check_branch
      %25 = sbr.rel (0) target = $region25
    $region24: #{linear_net_forward.1} parent=1 // pred_region
      %27 = vsyncadd [#allocation3], 0
      %s28 = sshll.u32 %s5, 4
      %s29 = int_to_ptr.hbm [resolvable:$true] %s28
      %s30 = sshll.u32 [#allocation2], 4
      %s31 = int_to_ptr.vmem [resolvable:$true] %s30
      %36 = dma.hbm_to_vmem [thread:$0]  %s29, 1024, %s31, [#allocation3], 64, 64, 4
    $region25: #{linear_net_forward.1} parent=1 // pred_fallthru
      _
    // Predicated region
    $region26: #{linear_net_forward.1} parent=1 // pred_check
      _
    $region27: #{linear_net_forward.1} parent=1 // pred_check_branch
      %38 = sbr.rel (0) target = $region29
    $region28: #{linear_net_forward.1} parent=1 // pred_region
      _
    $region29: #{linear_net_forward.1} parent=1 // pred_fallthru
      _
    // Predicated region
    $region30: #{linear_net_forward.1} parent=1 // pred_check
      _
    $region31: #{linear_net_forward.1} parent=1 // pred_check_branch
      %40 = sbr.rel (0) target = $region33
    $region32: #{linear_net_forward.1} parent=1 // pred_region
      %42 = dma.done [#allocation3], 1024
    $region33: #{linear_net_forward.1} parent=1 // pred_fallthru
      _
    %v44 = vld [vmem:[%s0] sm:$0xff]
    %v45 = vld [vmem:[%s0 + $0x8] sm:$0xff]
    %v46 = vld [vmem:[%s0 + $0x10] sm:$0xff]
    %v47 = vld [vmem:[%s0 + $0x18] sm:$0xf]
    %v48 = vld [vmem:[%s1] sm:$0xf]
    %v49 = vld [vmem:[%s1 + $0x4] sm:$0xf]
    %v50 = vld [vmem:[%s1 + $0x8] sm:$0xf]
    %v51 = vld [vmem:[%s1 + $0xc] sm:$0xf]
    %v52 = vld [vmem:[%s1 + $0x10] sm:$0xf]
    %v53 = vld [vmem:[%s1 + $0x14] sm:$0xf]
    %v54 = vld [vmem:[%s1 + $0x18] sm:$0xf]
    %v55 = vld [vmem:[%s1 + $0x1c] sm:$0xf]
    %v56 = vld [vmem:[%s1 + $0x20] sm:$0xf]
    %v57 = vld [vmem:[%s1 + $0x24] sm:$0xf]
    %v58 = vld [vmem:[%s1 + $0x28] sm:$0xf]
    %v59 = vld [vmem:[%s1 + $0x2c] sm:$0xf]
    %v60 = vld [vmem:[%s1 + $0x30] sm:$0xf]
    %v61 = vld [vmem:[%s1 + $0x34] sm:$0xf]
    %v62 = vld [vmem:[%s1 + $0x38] sm:$0xf]
    %v63 = vld [vmem:[%s1 + $0x3c] sm:$0xf]
    %v64 = vld [vmem:[%s1 + $0x40] sm:$0xf]
    %v65 = vld [vmem:[%s1 + $0x44] sm:$0xf]
    %v66 = vld [vmem:[%s1 + $0x48] sm:$0xf]
    %v67 = vld [vmem:[%s1 + $0x4c] sm:$0xf]
    %v68 = vld [vmem:[%s1 + $0x50] sm:$0xf]
    %v69 = vld [vmem:[%s1 + $0x54] sm:$0xf]
    %v70 = vld [vmem:[%s1 + $0x58] sm:$0xf]
    %v71 = vld [vmem:[%s1 + $0x5c] sm:$0xf]
    %v72 = vld [vmem:[%s1 + $0x60] sm:$0xf]
    %v73 = vld [vmem:[%s1 + $0x64] sm:$0xf]
    %v74 = vld [vmem:[%s1 + $0x68] sm:$0xf]
    %v75 = vld [vmem:[%s1 + $0x6c] sm:$0xf]
    %v76 = vld [vmem:[%s1 + $0x70] sm:$0xf]
    %v77 = vld [vmem:[%s1 + $0x74] sm:$0xf]
    %v78 = vld [vmem:[%s1 + $0x78] sm:$0xf]
    %v79 = vld [vmem:[%s1 + $0x7c] sm:$0xf]
    %v80 = vld [vmem:[%s1 + $0x80] sm:$0xf]
    %v81 = vld [vmem:[%s1 + $0x84] sm:$0xf]
    %v82 = vld [vmem:[%s1 + $0x88] sm:$0xf]
    %v83 = vld [vmem:[%s1 + $0x8c] sm:$0xf]
    %v84 = vld [vmem:[%s1 + $0x90] sm:$0xf]
    %v85 = vld [vmem:[%s1 + $0x94] sm:$0xf]
    %v86 = vld [vmem:[%s1 + $0x98] sm:$0xf]
    %v87 = vld [vmem:[%s1 + $0x9c] sm:$0xf]
    %v88 = vld [vmem:[%s1 + $0xa0] sm:$0xf]
    %v89 = vld [vmem:[%s1 + $0xa4] sm:$0xf]
    %v90 = vld [vmem:[%s1 + $0xa8] sm:$0xf]
    %v91 = vld [vmem:[%s1 + $0xac] sm:$0xf]
    %v92 = vld [vmem:[%s1 + $0xb0] sm:$0xf]
    %v93 = vld [vmem:[%s1 + $0xb4] sm:$0xf]
    %v94 = vld [vmem:[%s1 + $0xb8] sm:$0xf]
    %v95 = vld [vmem:[%s1 + $0xbc] sm:$0xf]
    %v96 = vld [vmem:[%s1 + $0xc0] sm:$0xf]
    %v97 = vld [vmem:[%s1 + $0xc4] sm:$0xf]
    %v98 = vld [vmem:[%s1 + $0xc8] sm:$0xf]
    %v99 = vld [vmem:[%s1 + $0xcc] sm:$0xf]
    %v100 = vld [vmem:[%s1 + $0xd0] sm:$0xf]
    %v101 = vld [vmem:[%s1 + $0xd4] sm:$0xf]
    %v102 = vld [vmem:[%s1 + $0xd8] sm:$0xf]
    %v103 = vld [vmem:[%s1 + $0xdc] sm:$0xf]
    %v104 = vld [vmem:[%s1 + $0xe0] sm:$0xf]
    %v105 = vld [vmem:[%s1 + $0xe4] sm:$0xf]
    %v106 = vld [vmem:[%s1 + $0xe8] sm:$0xf]
    %v107 = vld [vmem:[%s1 + $0xec] sm:$0xf]
    %v108 = vld [vmem:[%s1 + $0xf0] sm:$0xf]
    %v109 = vld [vmem:[%s1 + $0xf4] sm:$0xf]
    %v110 = vld [vmem:[%s1 + $0xf8] sm:$0xf]
    %v111 = vld [vmem:[%s1 + $0xfc] sm:$0xf]
    %v112 = vld [vmem:[%s1 + $0x100] sm:$0xf]
    %v113 = vld [vmem:[%s1 + $0x104] sm:$0xf]
    %v114 = vld [vmem:[%s1 + $0x108] sm:$0xf]
    %v115 = vld [vmem:[%s1 + $0x10c] sm:$0xf]
    %v116 = vld [vmem:[%s1 + $0x110] sm:$0xf]
    %v117 = vld [vmem:[%s1 + $0x114] sm:$0xf]
    %v118 = vld [vmem:[%s1 + $0x118] sm:$0xf]
    %v119 = vld [vmem:[%s1 + $0x11c] sm:$0xf]
    %v120 = vld [vmem:[%s1 + $0x120] sm:$0xf]
    %v121 = vld [vmem:[%s1 + $0x124] sm:$0xf]
    %v122 = vld [vmem:[%s1 + $0x128] sm:$0xf]
    %v123 = vld [vmem:[%s1 + $0x12c] sm:$0xf]
    %v124 = vld [vmem:[%s1 + $0x130] sm:$0xf]
    %v125 = vld [vmem:[%s1 + $0x134] sm:$0xf]
    %v126 = vld [vmem:[%s1 + $0x138] sm:$0xf]
    %v127 = vld [vmem:[%s1 + $0x13c] sm:$0xf]
    %v128 = vld [vmem:[%s1 + $0x140] sm:$0xf]
    %v129 = vld [vmem:[%s1 + $0x144] sm:$0xf]
    %v130 = vld [vmem:[%s1 + $0x148] sm:$0xf]
    %v131 = vld [vmem:[%s1 + $0x14c] sm:$0xf]
    %v132 = vld [vmem:[%s1 + $0x150] sm:$0xf]
    %v133 = vld [vmem:[%s1 + $0x154] sm:$0xf]
    %v134 = vld [vmem:[%s1 + $0x158] sm:$0xf]
    %v135 = vld [vmem:[%s1 + $0x15c] sm:$0xf]
    %v136 = vld [vmem:[%s1 + $0x160] sm:$0xf]
    %v137 = vld [vmem:[%s1 + $0x164] sm:$0xf]
    %v138 = vld [vmem:[%s1 + $0x168] sm:$0xf]
    %v139 = vld [vmem:[%s1 + $0x16c] sm:$0xf]
    %v140 = vld [vmem:[%s1 + $0x170] sm:$0xf]
    %v141 = vld [vmem:[%s1 + $0x174] sm:$0xf]
    %v142 = vld [vmem:[%s1 + $0x178] sm:$0xf]
    %v143 = vld [vmem:[%s1 + $0x17c] sm:$0xf]
    %v144 = vld [vmem:[%s1 + $0x180] sm:$0xf]
    %v145 = vld [vmem:[%s1 + $0x184] sm:$0xf]
    %v146 = vld [vmem:[%s2] sm:$0x1]
    %v148 = vperm.slane %v146, 0
    %v154 = vunpack.c.l.b16 %v44
    %v155 = vunpack.c.h.b16 %v44
    %v156 = vunpack.c.l.b16 %v45
    %v157 = vunpack.c.h.b16 %v45
    %v158 = vunpack.c.l.b16 %v46
    %v159 = vunpack.c.h.b16 %v46
    %v160 = vunpack.c.l.b16 %v47
    %v161 = vpack.c.b16 %v154, %v154
    %v162 = vpack.c.b16 %v155, %v155
    %v163 = vpack.c.b16 %v156, %v156
    %v164 = vpack.c.b16 %v157, %v157
    %v165 = vpack.c.b16 %v158, %v158
    %v166 = vpack.c.b16 %v159, %v159
    %v167 = vpack.c.b16 %v160, %v160
    %v272 = vunpack.c.l.b16 %v48
    %v273 = vunpack.c.l.b16 %v49
    %v274 = vunpack.c.l.b16 %v50
    %v275 = vunpack.c.l.b16 %v51
    %v276 = vunpack.c.l.b16 %v52
    %v277 = vunpack.c.l.b16 %v53
    %v278 = vunpack.c.l.b16 %v54
    %v279 = vunpack.c.l.b16 %v55
    %v280 = vunpack.c.l.b16 %v56
    %v281 = vunpack.c.l.b16 %v57
    %v282 = vunpack.c.l.b16 %v58
    %v283 = vunpack.c.l.b16 %v59
    %v284 = vunpack.c.l.b16 %v60
    %v285 = vunpack.c.l.b16 %v61
    %v286 = vunpack.c.l.b16 %v62
    %v287 = vunpack.c.l.b16 %v63
    %v288 = vunpack.c.l.b16 %v64
    %v289 = vunpack.c.l.b16 %v65
    %v290 = vunpack.c.l.b16 %v66
    %v291 = vunpack.c.l.b16 %v67
    %v292 = vunpack.c.l.b16 %v68
    %v293 = vunpack.c.l.b16 %v69
    %v294 = vunpack.c.l.b16 %v70
    %v295 = vunpack.c.l.b16 %v71
    %v296 = vunpack.c.l.b16 %v72
    %v297 = vunpack.c.l.b16 %v73
    %v298 = vunpack.c.l.b16 %v74
    %v299 = vunpack.c.l.b16 %v75
    %v300 = vunpack.c.l.b16 %v76
    %v301 = vunpack.c.l.b16 %v77
    %v302 = vunpack.c.l.b16 %v78
    %v303 = vunpack.c.l.b16 %v79
    %v304 = vunpack.c.l.b16 %v80
    %v305 = vunpack.c.l.b16 %v81
    %v306 = vunpack.c.l.b16 %v82
    %v307 = vunpack.c.l.b16 %v83
    %v308 = vunpack.c.l.b16 %v84
    %v309 = vunpack.c.l.b16 %v85
    %v310 = vunpack.c.l.b16 %v86
    %v311 = vunpack.c.l.b16 %v87
    %v312 = vunpack.c.l.b16 %v88
    %v313 = vunpack.c.l.b16 %v89
    %v314 = vunpack.c.l.b16 %v90
    %v315 = vunpack.c.l.b16 %v91
    %v316 = vunpack.c.l.b16 %v92
    %v317 = vunpack.c.l.b16 %v93
    %v318 = vunpack.c.l.b16 %v94
    %v319 = vunpack.c.l.b16 %v95
    %v320 = vunpack.c.l.b16 %v96
    %v321 = vunpack.c.l.b16 %v97
    %v322 = vunpack.c.l.b16 %v98
    %v323 = vunpack.c.l.b16 %v99
    %v324 = vunpack.c.l.b16 %v100
    %v325 = vunpack.c.l.b16 %v101
    %v326 = vunpack.c.l.b16 %v102
    %v327 = vunpack.c.l.b16 %v103
    %v328 = vunpack.c.l.b16 %v104
    %v329 = vunpack.c.l.b16 %v105
    %v330 = vunpack.c.l.b16 %v106
    %v331 = vunpack.c.l.b16 %v107
    %v332 = vunpack.c.l.b16 %v108
    %v333 = vunpack.c.l.b16 %v109
    %v334 = vunpack.c.l.b16 %v110
    %v335 = vunpack.c.l.b16 %v111
    %v336 = vunpack.c.l.b16 %v112
    %v337 = vunpack.c.l.b16 %v113
    %v338 = vunpack.c.l.b16 %v114
    %v339 = vunpack.c.l.b16 %v115
    %v340 = vunpack.c.l.b16 %v116
    %v341 = vunpack.c.l.b16 %v117
    %v342 = vunpack.c.l.b16 %v118
    %v343 = vunpack.c.l.b16 %v119
    %v344 = vunpack.c.l.b16 %v120
    %v345 = vunpack.c.l.b16 %v121
    %v346 = vunpack.c.l.b16 %v122
    %v347 = vunpack.c.l.b16 %v123
    %v348 = vunpack.c.l.b16 %v124
    %v349 = vunpack.c.l.b16 %v125
    %v350 = vunpack.c.l.b16 %v126
    %v351 = vunpack.c.l.b16 %v127
    %v352 = vunpack.c.l.b16 %v128
    %v353 = vunpack.c.l.b16 %v129
    %v354 = vunpack.c.l.b16 %v130
    %v355 = vunpack.c.l.b16 %v131
    %v356 = vunpack.c.l.b16 %v132
    %v357 = vunpack.c.l.b16 %v133
    %v358 = vunpack.c.l.b16 %v134
    %v359 = vunpack.c.l.b16 %v135
    %v360 = vunpack.c.l.b16 %v136
    %v361 = vunpack.c.l.b16 %v137
    %v362 = vunpack.c.l.b16 %v138
    %v363 = vunpack.c.l.b16 %v139
    %v364 = vunpack.c.l.b16 %v140
    %v365 = vunpack.c.l.b16 %v141
    %v366 = vunpack.c.l.b16 %v142
    %v367 = vunpack.c.l.b16 %v143
    %v368 = vunpack.c.l.b16 %v144
    %v369 = vunpack.c.l.b16 %v145
    %v370 = vpack.c.b16 %v273, %v272
    %v371 = vpack.c.b16 %v275, %v274
    %v372 = vpack.c.b16 %v277, %v276
    %v373 = vpack.c.b16 %v279, %v278
    %v374 = vpack.c.b16 %v281, %v280
    %v375 = vpack.c.b16 %v283, %v282
    %v376 = vpack.c.b16 %v285, %v284
    %v377 = vpack.c.b16 %v287, %v286
    %v378 = vpack.c.b16 %v289, %v288
    %v379 = vpack.c.b16 %v291, %v290
    %v380 = vpack.c.b16 %v293, %v292
    %v381 = vpack.c.b16 %v295, %v294
    %v382 = vpack.c.b16 %v297, %v296
    %v383 = vpack.c.b16 %v299, %v298
    %v384 = vpack.c.b16 %v301, %v300
    %v385 = vpack.c.b16 %v303, %v302
    %v386 = vpack.c.b16 %v305, %v304
    %v387 = vpack.c.b16 %v307, %v306
    %v388 = vpack.c.b16 %v309, %v308
    %v389 = vpack.c.b16 %v311, %v310
    %v390 = vpack.c.b16 %v313, %v312
    %v391 = vpack.c.b16 %v315, %v314
    %v392 = vpack.c.b16 %v317, %v316
    %v393 = vpack.c.b16 %v319, %v318
    %v394 = vpack.c.b16 %v321, %v320
    %v395 = vpack.c.b16 %v323, %v322
    %v396 = vpack.c.b16 %v325, %v324
    %v397 = vpack.c.b16 %v327, %v326
    %v398 = vpack.c.b16 %v329, %v328
    %v399 = vpack.c.b16 %v331, %v330
    %v400 = vpack.c.b16 %v333, %v332
    %v401 = vpack.c.b16 %v335, %v334
    %v402 = vpack.c.b16 %v337, %v336
    %v403 = vpack.c.b16 %v339, %v338
    %v404 = vpack.c.b16 %v341, %v340
    %v405 = vpack.c.b16 %v343, %v342
    %v406 = vpack.c.b16 %v345, %v344
    %v407 = vpack.c.b16 %v347, %v346
    %v408 = vpack.c.b16 %v349, %v348
    %v409 = vpack.c.b16 %v351, %v350
    %v410 = vpack.c.b16 %v353, %v352
    %v411 = vpack.c.b16 %v355, %v354
    %v412 = vpack.c.b16 %v357, %v356
    %v413 = vpack.c.b16 %v359, %v358
    %v414 = vpack.c.b16 %v361, %v360
    %v415 = vpack.c.b16 %v363, %v362
    %v416 = vpack.c.b16 %v365, %v364
    %v417 = vpack.c.b16 %v367, %v366
    %v418 = vpack.c.b16 %v369, %v368
    %vm468 = vcmask 130048
    %v470 = vsel %vm468, %v167, 0
    %472 = vmatpush.bf16.msra.mxu0 %v377
    %473 = vmatpush.bf16.msra.mxu0 %v376
    %474 = vmatpush.bf16.msra.mxu0 %v375
    %475 = vmatpush.bf16.msra.mxu0 %v374
    %476 = vmatpush.bf16.msra.mxu0 %v373
    %477 = vmatpush.bf16.msra.mxu0 %v372
    %478 = vmatpush.bf16.msra.mxu0 %v371
    %479 = vmatpush.bf16.msra.mxu0 %v370
    %480 = vmatmul.bf16.gmra.mxu0 %v161
    %v481 = vpop.f32.mrf.mxu0
    %v482 = vadd.f32 %v148, %v481
    %v483 = vpop.f32.mrf.mxu0
    %484 = vdwg.mxu0
    %485 = vmatpush.bf16.msra.mxu0 %v385
    %486 = vmatpush.bf16.msra.mxu0 %v384
    %487 = vmatpush.bf16.msra.mxu0 %v383
    %488 = vmatpush.bf16.msra.mxu0 %v382
    %489 = vmatpush.bf16.msra.mxu0 %v381
    %490 = vmatpush.bf16.msra.mxu0 %v380
    %491 = vmatpush.bf16.msra.mxu0 %v379
    %492 = vmatpush.bf16.msra.mxu0 %v378
    %493 = vmatmul.bf16.gmra.mxu0 %v162
    %v494 = vpop.f32.mrf.mxu0
    %v495 = vadd.f32 %v482, %v494
    %v496 = vpop.f32.mrf.mxu0
    %497 = vdwg.mxu0
    %498 = vmatpush.bf16.msra.mxu0 %v393
    %499 = vmatpush.bf16.msra.mxu0 %v392
    %500 = vmatpush.bf16.msra.mxu0 %v391
    %501 = vmatpush.bf16.msra.mxu0 %v390
    %502 = vmatpush.bf16.msra.mxu0 %v389
    %503 = vmatpush.bf16.msra.mxu0 %v388
    %504 = vmatpush.bf16.msra.mxu0 %v387
    %505 = vmatpush.bf16.msra.mxu0 %v386
    %506 = vmatmul.bf16.gmra.mxu0 %v163
    %v507 = vpop.f32.mrf.mxu0
    %v508 = vadd.f32 %v495, %v507
    %v509 = vpop.f32.mrf.mxu0
    %510 = vdwg.mxu0
    %511 = vmatpush.bf16.msra.mxu0 %v401
    %512 = vmatpush.bf16.msra.mxu0 %v400
    %513 = vmatpush.bf16.msra.mxu0 %v399
    %514 = vmatpush.bf16.msra.mxu0 %v398
    %515 = vmatpush.bf16.msra.mxu0 %v397
    %516 = vmatpush.bf16.msra.mxu0 %v396
    %517 = vmatpush.bf16.msra.mxu0 %v395
    %518 = vmatpush.bf16.msra.mxu0 %v394
    %519 = vmatmul.bf16.gmra.mxu0 %v164
    %v520 = vpop.f32.mrf.mxu0
    %v521 = vadd.f32 %v508, %v520
    %v522 = vpop.f32.mrf.mxu0
    %523 = vdwg.mxu0
    %524 = vmatpush.bf16.msra.mxu0 %v409
    %525 = vmatpush.bf16.msra.mxu0 %v408
    %526 = vmatpush.bf16.msra.mxu0 %v407
    %527 = vmatpush.bf16.msra.mxu0 %v406
    %528 = vmatpush.bf16.msra.mxu0 %v405
    %529 = vmatpush.bf16.msra.mxu0 %v404
    %530 = vmatpush.bf16.msra.mxu0 %v403
    %531 = vmatpush.bf16.msra.mxu0 %v402
    %532 = vmatmul.bf16.gmra.mxu0 %v165
    %v533 = vpop.f32.mrf.mxu0
    %v534 = vadd.f32 %v521, %v533
    %v535 = vpop.f32.mrf.mxu0
    %536 = vdwg.mxu0
    %537 = vmatpush.bf16.msra.mxu0 %v417
    %538 = vmatpush.bf16.msra.mxu0 %v416
    %539 = vmatpush.bf16.msra.mxu0 %v415
    %540 = vmatpush.bf16.msra.mxu0 %v414
    %541 = vmatpush.bf16.msra.mxu0 %v413
    %542 = vmatpush.bf16.msra.mxu0 %v412
    %543 = vmatpush.bf16.msra.mxu0 %v411
    %544 = vmatpush.bf16.msra.mxu0 %v410
    %545 = vmatmul.bf16.gmra.mxu0 %v166
    %v546 = vpop.f32.mrf.mxu0
    %v547 = vadd.f32 %v534, %v546
    %v548 = vpop.f32.mrf.mxu0
    %549 = vdwg.mxu0
    %550 = vmatpush.bf16.msra.mxu0 0
    %551 = vmatpush.bf16.msra.mxu0 0
    %552 = vmatpush.bf16.msra.mxu0 0
    %553 = vmatpush.bf16.msra.mxu0 0
    %554 = vmatpush.bf16.msra.mxu0 0
    %555 = vmatpush.bf16.msra.mxu0 0
    %556 = vmatpush.bf16.msra.mxu0 0
    %557 = vmatpush.bf16.msra.mxu0 %v418
    %558 = vmatmul.bf16.gmra.mxu0 %v470
    %v559 = vpop.f32.mrf.mxu0
    %v560 = vadd.f32 %v547, %v559
    %v561 = vpop.f32.mrf.mxu0
    %562 = vdwg.mxu0
    %v563 = vmax.f32 %v560, 0.0
    %v564 = vpack.c.bf16 %v563, %v563
    %v565 = vld [vmem:[%s3] sm:$0xf]
    %v566 = vld [vmem:[%s3 + $0x4] sm:$0xf]
    %v567 = vld [vmem:[%s3 + $0x8] sm:$0xf]
    %v568 = vld [vmem:[%s3 + $0xc] sm:$0xf]
    %v569 = vld [vmem:[%s3 + $0x10] sm:$0xf]
    %v570 = vld [vmem:[%s3 + $0x14] sm:$0xf]
    %v571 = vld [vmem:[%s3 + $0x18] sm:$0xf]
    %v572 = vld [vmem:[%s3 + $0x1c] sm:$0xf]
    %v573 = vld [vmem:[%s3 + $0x20] sm:$0xf]
    %v574 = vld [vmem:[%s3 + $0x24] sm:$0xf]
    %v575 = vld [vmem:[%s3 + $0x28] sm:$0xf]
    %v576 = vld [vmem:[%s3 + $0x2c] sm:$0xf]
    %v577 = vld [vmem:[%s3 + $0x30] sm:$0xf]
    %v578 = vld [vmem:[%s3 + $0x34] sm:$0xf]
    %v579 = vld [vmem:[%s3 + $0x38] sm:$0xf]
    %v580 = vld [vmem:[%s3 + $0x3c] sm:$0xf]
    %v581 = vld [vmem:[%s4] sm:$0x1]
    %v583 = vperm.slane %v581, 0
    %v601 = vunpack.c.l.b16 %v565
    %v602 = vunpack.c.l.b16 %v566
    %v603 = vunpack.c.l.b16 %v567
    %v604 = vunpack.c.l.b16 %v568
    %v605 = vunpack.c.l.b16 %v569
    %v606 = vunpack.c.l.b16 %v570
    %v607 = vunpack.c.l.b16 %v571
    %v608 = vunpack.c.l.b16 %v572
    %v609 = vunpack.c.l.b16 %v573
    %v610 = vunpack.c.l.b16 %v574
    %v611 = vunpack.c.l.b16 %v575
    %v612 = vunpack.c.l.b16 %v576
    %v613 = vunpack.c.l.b16 %v577
    %v614 = vunpack.c.l.b16 %v578
    %v615 = vunpack.c.l.b16 %v579
    %v616 = vunpack.c.l.b16 %v580
    %v617 = vpack.c.b16 %v602, %v601
    %v618 = vpack.c.b16 %v604, %v603
    %v619 = vpack.c.b16 %v606, %v605
    %v620 = vpack.c.b16 %v608, %v607
    %v621 = vpack.c.b16 %v610, %v609
    %v622 = vpack.c.b16 %v612, %v611
    %v623 = vpack.c.b16 %v614, %v613
    %v624 = vpack.c.b16 %v616, %v615
    %633 = vmatpush.bf16.msra.mxu0 %v624
    %634 = vmatpush.bf16.msra.mxu0 %v623
    %635 = vmatpush.bf16.msra.mxu0 %v622
    %636 = vmatpush.bf16.msra.mxu0 %v621
    %637 = vmatpush.bf16.msra.mxu0 %v620
    %638 = vmatpush.bf16.msra.mxu0 %v619
    %639 = vmatpush.bf16.msra.mxu0 %v618
    %640 = vmatpush.bf16.msra.mxu0 %v617
    %641 = vmatmul.bf16.gmra.mxu0 %v564
    %v642 = vpop.f32.mrf.mxu0
    %v643 = vadd.f32 %v583, %v642
    %v644 = vpop.f32.mrf.mxu0
    %645 = vdwg.mxu0
    %v646 = vmax.f32 %v643, 0.0
    %v647 = vpack.c.bf16 %v646, %v646
    %v648 = vld [vmem:[#allocation2] sm:$0xf]
    %v649 = vld [vmem:[#allocation2 + $0x4] sm:$0xf]
    %v650 = vld [vmem:[#allocation2 + $0x8] sm:$0xf]
    %v651 = vld [vmem:[#allocation2 + $0xc] sm:$0xf]
    %v652 = vld [vmem:[#allocation2 + $0x10] sm:$0xf]
    %v653 = vld [vmem:[#allocation2 + $0x14] sm:$0xf]
    %v654 = vld [vmem:[#allocation2 + $0x18] sm:$0xf]
    %v655 = vld [vmem:[#allocation2 + $0x1c] sm:$0xf]
    %v656 = vld [vmem:[#allocation2 + $0x20] sm:$0xf]
    %v657 = vld [vmem:[#allocation2 + $0x24] sm:$0xf]
    %v658 = vld [vmem:[#allocation2 + $0x28] sm:$0xf]
    %v659 = vld [vmem:[#allocation2 + $0x2c] sm:$0xf]
    %v660 = vld [vmem:[#allocation2 + $0x30] sm:$0xf]
    %v661 = vld [vmem:[#allocation2 + $0x34] sm:$0xf]
    %v662 = vld [vmem:[#allocation2 + $0x38] sm:$0xf]
    %v663 = vld [vmem:[#allocation2 + $0x3c] sm:$0xf]
    %v664 = vld [vmem:[%s6] sm:$0x1]
    %v666 = vperm.slane %v664, 0
    %v684 = vunpack.c.l.b16 %v648
    %v685 = vunpack.c.l.b16 %v649
    %v686 = vunpack.c.l.b16 %v650
    %v687 = vunpack.c.l.b16 %v651
    %v688 = vunpack.c.l.b16 %v652
    %v689 = vunpack.c.l.b16 %v653
    %v690 = vunpack.c.l.b16 %v654
    %v691 = vunpack.c.l.b16 %v655
    %v692 = vunpack.c.l.b16 %v656
    %v693 = vunpack.c.l.b16 %v657
    %v694 = vunpack.c.l.b16 %v658
    %v695 = vunpack.c.l.b16 %v659
    %v696 = vunpack.c.l.b16 %v660
    %v697 = vunpack.c.l.b16 %v661
    %v698 = vunpack.c.l.b16 %v662
    %v699 = vunpack.c.l.b16 %v663
    %v700 = vpack.c.b16 %v685, %v684
    %v701 = vpack.c.b16 %v687, %v686
    %v702 = vpack.c.b16 %v689, %v688
    %v703 = vpack.c.b16 %v691, %v690
    %v704 = vpack.c.b16 %v693, %v692
    %v705 = vpack.c.b16 %v695, %v694
    %v706 = vpack.c.b16 %v697, %v696
    %v707 = vpack.c.b16 %v699, %v698
    %716 = vmatpush.bf16.msra.mxu0 %v707
    %717 = vmatpush.bf16.msra.mxu0 %v706
    %718 = vmatpush.bf16.msra.mxu0 %v705
    %719 = vmatpush.bf16.msra.mxu0 %v704
    %720 = vmatpush.bf16.msra.mxu0 %v703
    %721 = vmatpush.bf16.msra.mxu0 %v702
    %722 = vmatpush.bf16.msra.mxu0 %v701
    %723 = vmatpush.bf16.msra.mxu0 %v700
    %724 = vmatmul.bf16.gmra.mxu0 %v647
    %v725 = vpop.f32.mrf.mxu0
    %v726 = vadd.f32 %v666, %v725
    %v727 = vpop.f32.mrf.mxu0
    %728 = vdwg.mxu0
    %v729 = vlaneseq
    %v730 = vand.u32 %v729, 127
    %vm731 = vcmp.lt.s32.totalorder %v730, 10
    %v732 = vsel %vm731, %v726, -1e+30
    %733 = vmax.xlane.f32.xlu0 %v732
    %v734 = vpop.xlane.xlu0 %733
    %v735 = vsub.f32 %v732, %v734
    %v736 = vmul.f32 %v735, 1.442695
    %v737 = vpow.pop %v736
    %738 = vadd.xlane.f32.xlu0 %v737
    %v739 = vpop.xlane.xlu0 %738
    %v740 = vlog2.pop %v739
    %v741 = vmul.f32 %v740, 0.6931472
    %v742 = vsub.f32 %v735, %v741
    %743 = vst [vmem:[#allocation5] sm:$0xff] %v742
    // Predicated region
    $region34: #{linear_net_forward.1} parent=1 // pred_check
      _
    $region35: #{linear_net_forward.1} parent=1 // pred_check_branch
      %745 = sbr.rel (0) target = $region37
    $region36: #{linear_net_forward.1} parent=1 // pred_region
      %747 = vsyncadd [#allocation4], 0
      %s749 = sshll.u32 [#allocation5], 4
      %s750 = int_to_ptr.vmem [resolvable:$true] %s749
      %s751 = sshll.u32 %s7, 4
      %s752 = int_to_ptr.hbm [resolvable:$true] %s751
      %754 = dma.vmem_to_hbm [thread:$0]  %s750, 128, %s752, [#allocation4]
    $region37: #{linear_net_forward.1} parent=1 // pred_fallthru
      _
    // Predicated region
    $region38: #{linear_net_forward.1} parent=1 // pred_check
      _
    $region39: #{linear_net_forward.1} parent=1 // pred_check_branch
      %756 = sbr.rel (0) target = $region41
    $region40: #{linear_net_forward.1} parent=1 // pred_region
      %758 = dma.done [#allocation4], 128
    $region41: #{linear_net_forward.1} parent=1 // pred_fallthru
      _
    %759 = vsyncpa [#allocation3], 1
    %760 = vsyncpa [#allocation4], 1

</llo_original>
